<compile_context>
chip_gen: v5e
topology: v5e:2x2
jax: 0.10.0
libtpu: 0.0.40
codegen_flags: <defaults>
</compile_context>

<pallas_src>
import functools
import math

import jax
import jax.numpy as jnp
from jax import lax
from jax.experimental import pallas as pl
from jax.experimental.pallas import tpu as pltpu


def _mha_kernel(xq_ref, xkv_ref, wq_ref, bq_ref, wk_ref, bk_ref, wv_ref, bv_ref,
                out_ref, *, bt, head, qk_size, v_size):
    """One batch tile (bt elements): fused projections + per-(b, h) attention."""
    lq = xq_ref.shape[1]
    lk = xkv_ref.shape[1]
    emd = xq_ref.shape[2]

    # Flatten the batch tile so each projection is one full-width MXU matmul.
    xq = xq_ref[...].reshape(bt * lq, emd)     # (bt*Lq, E)
    xkv = xkv_ref[...].reshape(bt * lk, emd)   # (bt*Lk, E)

    scale = 1.0 / math.sqrt(qk_size)

    # Fused projections for all heads / all batch elements in the tile.
    # Scale is folded into Q once (much cheaper than per-head (Lq,Lk) scaling).
    q = (jnp.dot(xq, wq_ref[...], preferred_element_type=jnp.float32)
         + bq_ref[...]) * scale                                        # (bt*Lq, H*QK)
    k = jnp.dot(xkv, wk_ref[...], preferred_element_type=jnp.float32) + bk_ref[...]   # (bt*Lk, H*QK)
    v = jnp.dot(xkv, wv_ref[...], preferred_element_type=jnp.float32) + bv_ref[...]   # (bt*Lk, H*VS)

    # TODO(synk): per-head lane slices below start at h*16 (not 128-aligned); pad
    # per-head weight slabs or use a batched dot_general if qk_size/v_size grow.
    for b in range(bt):                         # static; bt is tiny
        q_b = q[b * lq:(b + 1) * lq, :]         # sublane-aligned static slice
        k_b = k[b * lk:(b + 1) * lk, :]
        v_b = v[b * lk:(b + 1) * lk, :]
        for h in range(head):                   # static, fully visible to LLO
            q_h = q_b[:, h * qk_size:(h + 1) * qk_size]   # (Lq, QK)
            k_h = k_b[:, h * qk_size:(h + 1) * qk_size]   # (Lk, QK)
            v_h = v_b[:, h * v_size:(h + 1) * v_size]     # (Lk, VS)

            # scores: contract the last dims ('qd,kd->qk'); scale already in q.
            s = lax.dot_general(q_h, k_h, (((1,), (1,)), ((), ())),
                                preferred_element_type=jnp.float32)    # (Lq, Lk)

            # softmax over keys with deferred normalization:
            #   att = (exp(s-m) @ V) * 1/rowsum   -> normalization is (Lq, VS) work.
            s = s - jnp.max(s, axis=-1, keepdims=True)
            p = jnp.exp(s)                                             # EUP
            l = jnp.sum(p, axis=-1, keepdims=True)                     # XLU

            # TODO(synk): torch's `q_k.masked_fill(mask, 1e-09)` result is
            # discarded, so the mask is intentionally not applied here.

            att = jnp.dot(p, v_h, preferred_element_type=jnp.float32)  # (Lq, VS)
            att = att * pl.reciprocal(l, approx=False)   # exact (1e-5 tolerance)

            # Heads concatenated along the lane axis -> (Lq, head*VS) out slab
            # (>=128 lanes at production head*v_size; the wrapper transpose to the
            # torch (head, Lq*VS) layout is free layout plumbing).
            out_ref[b, :, h * v_size:(h + 1) * v_size] = att.astype(out_ref.dtype)


def _pick_batch_tile(batch, lq, lk):
    """Batch elements per grid step: amortize per-step overhead, keep >=2 steps."""
    if lq % 8 or lk % 8:       # in-kernel (bt,L,E)->(bt*L,E) merge wants 8-mult rows
        return 1
    target = max(1, 128 // max(lq, 1))      # aim for ~128-row MXU M-dim
    if batch >= 2:
        target = min(target, batch // 2)    # keep >=2 grid steps (v7x megacore)
    target = max(1, min(target, batch))
    for bt in range(target, 0, -1):         # largest divisor of batch <= target
        if batch % bt == 0:
            return bt
    return 1


def multi_atten_forward(x_q, x_k_v, mask, params, *, head, qk_size, v_size):
    del mask  # no effect on the output (see header comment)
    B, Lq, E = x_q.shape
    _, Lk, _ = x_k_v.shape
    hqk = head * qk_size
    hvs = head * v_size

    bt = _pick_batch_tile(B, Lq, Lk)

    # One-time layout plumbing outside the kernel (amortized, not per grid step).
    wq_t = params["wq"].T                       # (E, H*QK)
    wk_t = params["wk"].T                       # (E, H*QK)
    wv_t = params["wv"].T                       # (E, H*VS)
    bq = params["bq"].reshape(1, hqk)
    bk = params["bk"].reshape(1, hqk)
    bv = params["bv"].reshape(1, hvs)

    kernel = functools.partial(_mha_kernel, bt=bt, head=head,
                               qk_size=qk_size, v_size=v_size)

    # Scheduling hint for XLA (the kernel is latency/overhead bound at small sizes).
    flops = (2 * B * (Lq * E * hqk + Lk * E * hqk + Lk * E * hvs)
             + 2 * B * head * Lq * Lk * (qk_size + v_size))
    bytes_accessed = 4 * (B * Lq * E + B * Lk * E + 2 * E * hqk + E * hvs
                          + 2 * hqk + hvs + B * Lq * hvs)
    cost = pl.CostEstimate(flops=flops,
                           transcendentals=B * head * Lq * Lk,
                           bytes_accessed=bytes_accessed)

    out = pl.pallas_call(
        kernel,
        out_shape=jax.ShapeDtypeStruct((B, Lq, hvs), jnp.float32),
        grid_spec=pltpu.PrefetchScalarGridSpec(
            num_scalar_prefetch=0,
            grid=(B // bt,),
            in_specs=[
                pl.BlockSpec((bt, Lq, E), lambda b: (b, 0, 0)),    # x_q
                pl.BlockSpec((bt, Lk, E), lambda b: (b, 0, 0)),    # x_k_v
                pl.BlockSpec((E, hqk), lambda b: (0, 0)),          # Wq^T
                pl.BlockSpec((1, hqk), lambda b: (0, 0)),          # bq
                pl.BlockSpec((E, hqk), lambda b: (0, 0)),          # Wk^T
                pl.BlockSpec((1, hqk), lambda b: (0, 0)),          # bk
                pl.BlockSpec((E, hvs), lambda b: (0, 0)),          # Wv^T
                pl.BlockSpec((1, hvs), lambda b: (0, 0)),          # bv
            ],
            out_specs=pl.BlockSpec((bt, Lq, hvs), lambda b: (b, 0, 0)),
        ),
        compiler_params=pltpu.CompilerParams(
            dimension_semantics=("parallel",)),
        cost_estimate=cost,
    )(x_q, x_k_v, wq_t, bq, wk_t, bk, wv_t, bv)

    # (B, Lq, head, VS) -> torch (B, head, Lq*VS): wrapper-side layout plumbing
    # so the kernel's store stays lane-dense.
    out = out.reshape(B, Lq, head, v_size).transpose(0, 2, 1, 3)
    return out.reshape(B, head, Lq * v_size)


def _init_params(key, emd_size, qk_size, v_size, head):
    """Deterministic nn.Linear-style init: U(-1/sqrt(fan_in), 1/sqrt(fan_in))."""
    ks = jax.random.split(key, 6)
    bound = 1.0 / math.sqrt(emd_size)

    def u(k, shape):
        return jax.random.uniform(k, shape, jnp.float32, -bound, bound)

    return {
        "wq": u(ks[0], (qk_size * head, emd_size)),
        "bq": u(ks[1], (1, qk_size * head)),
        "wk": u(ks[2], (qk_size * head, emd_size)),
        "bk": u(ks[3], (1, qk_size * head)),
        "wv": u(ks[4], (v_size * head, emd_size)),
        "bv": u(ks[5], (1, v_size * head)),
    }


def _reference(x_q, x_k_v, params, *, head, qk_size, v_size):
    B, Lq, _ = x_q.shape
    Lk = x_k_v.shape[1]
    q = x_q @ params["wq"].T + params["bq"].reshape(-1)
    k = x_k_v @ params["wk"].T + params["bk"].reshape(-1)
    v = x_k_v @ params["wv"].T + params["bv"].reshape(-1)
    q = q.reshape(B, Lq, head, qk_size).transpose(0, 2, 1, 3)
    k = k.reshape(B, Lk, head, qk_size).transpose(0, 2, 1, 3)
    v = v.reshape(B, Lk, head, v_size).transpose(0, 2, 1, 3)
    s = jnp.einsum("bhqd,bhkd->bhqk", q, k) / math.sqrt(qk_size)
    p = jax.nn.softmax(s, axis=-1)
    att = jnp.einsum("bhqk,bhkd->bhqd", p, v)
    return att.reshape(B, head, Lq * v_size)


if __name__ == "__main__":
    B, Lq, Lk = 2, 8, 8
    EMD, QK, VS, HEAD = 32, 16, 16, 4

    key = jax.random.PRNGKey(0)
    k_params, k_xq, k_xkv, k_mask = jax.random.split(key, 4)

    params = _init_params(k_params, EMD, QK, VS, HEAD)
    x_q = jax.random.normal(k_xq, (B, Lq, EMD), jnp.float32)
    x_k_v = jax.random.normal(k_xkv, (B, Lk, EMD), jnp.float32)
    mask = jax.random.bernoulli(k_mask, 0.2, (B, Lq, Lk))  # no-op in torch module

    out = multi_atten_forward(x_q, x_k_v, mask, params,
                              head=HEAD, qk_size=QK, v_size=VS)
    out = jax.block_until_ready(out)

    ref = _reference(x_q, x_k_v, params, head=HEAD, qk_size=QK, v_size=VS)
    assert out.shape == (B, HEAD, Lq * VS), out.shape
    assert jnp.allclose(out, ref, rtol=1e-5, atol=1e-5), "mismatch vs reference"

    print("KERNEL_OK")
</pallas_src>

<mosaic_0001>
module attributes {stable_mosaic.version = 11 : i64} {
  func.func @_mha_kernel(%arg0: i32, %arg1: memref<1x8x32xf32, #tpu.memory_space<vmem>>, %arg2: memref<1x8x32xf32, #tpu.memory_space<vmem>>, %arg3: memref<32x64xf32, #tpu.memory_space<vmem>>, %arg4: memref<1x64xf32, #tpu.memory_space<vmem>>, %arg5: memref<32x64xf32, #tpu.memory_space<vmem>>, %arg6: memref<1x64xf32, #tpu.memory_space<vmem>>, %arg7: memref<32x64xf32, #tpu.memory_space<vmem>>, %arg8: memref<1x64xf32, #tpu.memory_space<vmem>>, %arg9: memref<1x8x64xf32, #tpu.memory_space<vmem>>) attributes {dimension_semantics = [#tpu.dimension_semantics<parallel>], iteration_bounds = array<i64: 2>, scalar_prefetch = 0 : i64, scratch_operands = 0 : i64, tpu.core_type = #tpu.core_type<tc>, window_params = [{transform_indices = @transform_0, window_bounds = array<i64: 1, 8, 32>}, {transform_indices = @transform_1, window_bounds = array<i64: 1, 8, 32>}, {pipeline_mode = #tpu.pipeline_mode<synchronous>, transform_indices = @transform_2, window_bounds = array<i64: 32, 64>}, {pipeline_mode = #tpu.pipeline_mode<synchronous>, transform_indices = @transform_3, window_bounds = array<i64: 1, 64>}, {pipeline_mode = #tpu.pipeline_mode<synchronous>, transform_indices = @transform_4, window_bounds = array<i64: 32, 64>}, {pipeline_mode = #tpu.pipeline_mode<synchronous>, transform_indices = @transform_5, window_bounds = array<i64: 1, 64>}, {pipeline_mode = #tpu.pipeline_mode<synchronous>, transform_indices = @transform_6, window_bounds = array<i64: 32, 64>}, {pipeline_mode = #tpu.pipeline_mode<synchronous>, transform_indices = @transform_7, window_bounds = array<i64: 1, 64>}, {transform_indices = @transform_8, window_bounds = array<i64: 1, 8, 64>}]} {
    %c0 = arith.constant 0 : index
    %c0_0 = arith.constant 0 : index
    %c0_1 = arith.constant 0 : index
    %0 = vector.load %arg1[%c0, %c0_0, %c0_1] : memref<1x8x32xf32, #tpu.memory_space<vmem>>, vector<1x8x32xf32>
    %1 = vector.shape_cast %0 : vector<1x8x32xf32> to vector<8x32xf32>
    %c0_2 = arith.constant 0 : index
    %c0_3 = arith.constant 0 : index
    %c0_4 = arith.constant 0 : index
    %2 = vector.load %arg2[%c0_2, %c0_3, %c0_4] : memref<1x8x32xf32, #tpu.memory_space<vmem>>, vector<1x8x32xf32>
    %3 = vector.shape_cast %2 : vector<1x8x32xf32> to vector<8x32xf32>
    %c0_5 = arith.constant 0 : index
    %c0_6 = arith.constant 0 : index
    %4 = vector.load %arg3[%c0_5, %c0_6] : memref<32x64xf32, #tpu.memory_space<vmem>>, vector<32x64xf32>
    %cst = arith.constant dense<0.000000e+00> : vector<8x64xf32>
    %5 = tpu.matmul %1, %4, %cst {dimension_numbers = #tpu.dot_dimension_numbers<[1], [0], [0], [1], [0, 0, 1, 1], [], []>} : vector<8x32xf32>, vector<32x64xf32>, vector<8x64xf32> -> vector<8x64xf32>
    %c0_7 = arith.constant 0 : index
    %c0_8 = arith.constant 0 : index
    %6 = vector.load %arg4[%c0_7, %c0_8] : memref<1x64xf32, #tpu.memory_space<vmem>>, vector<1x64xf32>
    %7 = vector.broadcast %6 : vector<1x64xf32> to vector<8x64xf32>
    %8 = arith.addf %5, %7 : vector<8x64xf32>
    %cst_9 = arith.constant 2.500000e-01 : f32
    %9 = vector.broadcast %cst_9 : f32 to vector<8x64xf32>
    %10 = arith.mulf %8, %9 : vector<8x64xf32>
    %c0_10 = arith.constant 0 : index
    %c0_11 = arith.constant 0 : index
    %11 = vector.load %arg5[%c0_10, %c0_11] : memref<32x64xf32, #tpu.memory_space<vmem>>, vector<32x64xf32>
    %cst_12 = arith.constant dense<0.000000e+00> : vector<8x64xf32>
    %12 = tpu.matmul %3, %11, %cst_12 {dimension_numbers = #tpu.dot_dimension_numbers<[1], [0], [0], [1], [0, 0, 1, 1], [], []>} : vector<8x32xf32>, vector<32x64xf32>, vector<8x64xf32> -> vector<8x64xf32>
    %c0_13 = arith.constant 0 : index
    %c0_14 = arith.constant 0 : index
    %13 = vector.load %arg6[%c0_13, %c0_14] : memref<1x64xf32, #tpu.memory_space<vmem>>, vector<1x64xf32>
    %14 = vector.broadcast %13 : vector<1x64xf32> to vector<8x64xf32>
    %15 = arith.addf %12, %14 : vector<8x64xf32>
    %c0_15 = arith.constant 0 : index
    %c0_16 = arith.constant 0 : index
    %16 = vector.load %arg7[%c0_15, %c0_16] : memref<32x64xf32, #tpu.memory_space<vmem>>, vector<32x64xf32>
    %cst_17 = arith.constant dense<0.000000e+00> : vector<8x64xf32>
    %17 = tpu.matmul %3, %16, %cst_17 {dimension_numbers = #tpu.dot_dimension_numbers<[1], [0], [0], [1], [0, 0, 1, 1], [], []>} : vector<8x32xf32>, vector<32x64xf32>, vector<8x64xf32> -> vector<8x64xf32>
    %c0_18 = arith.constant 0 : index
    %c0_19 = arith.constant 0 : index
    %18 = vector.load %arg8[%c0_18, %c0_19] : memref<1x64xf32, #tpu.memory_space<vmem>>, vector<1x64xf32>
    %19 = vector.broadcast %18 : vector<1x64xf32> to vector<8x64xf32>
    %20 = arith.addf %17, %19 : vector<8x64xf32>
    %21 = vector.extract_strided_slice %10 {offsets = [0, 0], sizes = [8, 16], strides = [1, 1]} : vector<8x64xf32> to vector<8x16xf32>
    %22 = vector.extract_strided_slice %15 {offsets = [0, 0], sizes = [8, 16], strides = [1, 1]} : vector<8x64xf32> to vector<8x16xf32>
    %23 = vector.extract_strided_slice %20 {offsets = [0, 0], sizes = [8, 16], strides = [1, 1]} : vector<8x64xf32> to vector<8x16xf32>
    %cst_20 = arith.constant dense<0.000000e+00> : vector<8x8xf32>
    %24 = tpu.matmul %21, %22, %cst_20 {dimension_numbers = #tpu.dot_dimension_numbers<[1], [1], [0], [0], [0, 0, 1, 0], [], []>} : vector<8x16xf32>, vector<8x16xf32>, vector<8x8xf32> -> vector<8x8xf32>
    %cst_21 = arith.constant dense<0xFF800000> : vector<8xf32>
    %25 = vector.multi_reduction <maximumf>, %24, %cst_21 [1] : vector<8x8xf32> to vector<8xf32>
    %26 = vector.shape_cast %25 : vector<8xf32> to vector<8x1xf32>
    %27 = vector.broadcast %26 : vector<8x1xf32> to vector<8x8xf32>
    %28 = arith.subf %24, %27 : vector<8x8xf32>
    %29 = math.exp %28 : vector<8x8xf32>
    %cst_22 = arith.constant dense<0.000000e+00> : vector<8xf32>
    %30 = vector.multi_reduction <add>, %29, %cst_22 [1] : vector<8x8xf32> to vector<8xf32>
    %31 = vector.shape_cast %30 : vector<8xf32> to vector<8x1xf32>
    %cst_23 = arith.constant dense<0.000000e+00> : vector<8x16xf32>
    %32 = tpu.matmul %29, %23, %cst_23 {dimension_numbers = #tpu.dot_dimension_numbers<[1], [0], [0], [1], [0, 0, 1, 1], [], []>} : vector<8x8xf32>, vector<8x16xf32>, vector<8x16xf32> -> vector<8x16xf32>
    %33 = tpu.reciprocal %31 : vector<8x1xf32> -> vector<8x1xf32>
    %34 = vector.broadcast %33 : vector<8x1xf32> to vector<8x16xf32>
    %35 = arith.mulf %32, %34 : vector<8x16xf32>
    %c0_24 = arith.constant 0 : index
    %c0_25 = arith.constant 0 : index
    %c0_26 = arith.constant 0 : index
    %36 = vector.load %arg9[%c0_24, %c0_25, %c0_26] : memref<1x8x64xf32, #tpu.memory_space<vmem>>, vector<1x8x16xf32>
    %37 = vector.shape_cast %36 : vector<1x8x16xf32> to vector<8x16xf32>
    %38 = vector.shape_cast %35 : vector<8x16xf32> to vector<1x8x16xf32>
    tpu.vector_store %arg9[%c0_24, %c0_25, %c0_26], %38 {strides = array<i32>} : memref<1x8x64xf32, #tpu.memory_space<vmem>>, vector<1x8x16xf32>,
    %39 = vector.extract_strided_slice %10 {offsets = [0, 16], sizes = [8, 16], strides = [1, 1]} : vector<8x64xf32> to vector<8x16xf32>
    %40 = vector.extract_strided_slice %15 {offsets = [0, 16], sizes = [8, 16], strides = [1, 1]} : vector<8x64xf32> to vector<8x16xf32>
    %41 = vector.extract_strided_slice %20 {offsets = [0, 16], sizes = [8, 16], strides = [1, 1]} : vector<8x64xf32> to vector<8x16xf32>
    %cst_27 = arith.constant dense<0.000000e+00> : vector<8x8xf32>
    %42 = tpu.matmul %39, %40, %cst_27 {dimension_numbers = #tpu.dot_dimension_numbers<[1], [1], [0], [0], [0, 0, 1, 0], [], []>} : vector<8x16xf32>, vector<8x16xf32>, vector<8x8xf32> -> vector<8x8xf32>
    %cst_28 = arith.constant dense<0xFF800000> : vector<8xf32>
    %43 = vector.multi_reduction <maximumf>, %42, %cst_28 [1] : vector<8x8xf32> to vector<8xf32>
    %44 = vector.shape_cast %43 : vector<8xf32> to vector<8x1xf32>
    %45 = vector.broadcast %44 : vector<8x1xf32> to vector<8x8xf32>
    %46 = arith.subf %42, %45 : vector<8x8xf32>
    %47 = math.exp %46 : vector<8x8xf32>
    %cst_29 = arith.constant dense<0.000000e+00> : vector<8xf32>
    %48 = vector.multi_reduction <add>, %47, %cst_29 [1] : vector<8x8xf32> to vector<8xf32>
    %49 = vector.shape_cast %48 : vector<8xf32> to vector<8x1xf32>
    %cst_30 = arith.constant dense<0.000000e+00> : vector<8x16xf32>
    %50 = tpu.matmul %47, %41, %cst_30 {dimension_numbers = #tpu.dot_dimension_numbers<[1], [0], [0], [1], [0, 0, 1, 1], [], []>} : vector<8x8xf32>, vector<8x16xf32>, vector<8x16xf32> -> vector<8x16xf32>
    %51 = tpu.reciprocal %49 : vector<8x1xf32> -> vector<8x1xf32>
    %52 = vector.broadcast %51 : vector<8x1xf32> to vector<8x16xf32>
    %53 = arith.mulf %50, %52 : vector<8x16xf32>
    %c0_31 = arith.constant 0 : index
    %c0_32 = arith.constant 0 : index
    %c16 = arith.constant 16 : index
    %54 = vector.load %arg9[%c0_31, %c0_32, %c16] : memref<1x8x64xf32, #tpu.memory_space<vmem>>, vector<1x8x16xf32>
    %55 = vector.shape_cast %54 : vector<1x8x16xf32> to vector<8x16xf32>
    %56 = vector.shape_cast %53 : vector<8x16xf32> to vector<1x8x16xf32>
    tpu.vector_store %arg9[%c0_31, %c0_32, %c16], %56 {strides = array<i32>} : memref<1x8x64xf32, #tpu.memory_space<vmem>>, vector<1x8x16xf32>,
    %57 = vector.extract_strided_slice %10 {offsets = [0, 32], sizes = [8, 16], strides = [1, 1]} : vector<8x64xf32> to vector<8x16xf32>
    %58 = vector.extract_strided_slice %15 {offsets = [0, 32], sizes = [8, 16], strides = [1, 1]} : vector<8x64xf32> to vector<8x16xf32>
    %59 = vector.extract_strided_slice %20 {offsets = [0, 32], sizes = [8, 16], strides = [1, 1]} : vector<8x64xf32> to vector<8x16xf32>
    %cst_33 = arith.constant dense<0.000000e+00> : vector<8x8xf32>
    %60 = tpu.matmul %57, %58, %cst_33 {dimension_numbers = #tpu.dot_dimension_numbers<[1], [1], [0], [0], [0, 0, 1, 0], [], []>} : vector<8x16xf32>, vector<8x16xf32>, vector<8x8xf32> -> vector<8x8xf32>
    %cst_34 = arith.constant dense<0xFF800000> : vector<8xf32>
    %61 = vector.multi_reduction <maximumf>, %60, %cst_34 [1] : vector<8x8xf32> to vector<8xf32>
    %62 = vector.shape_cast %61 : vector<8xf32> to vector<8x1xf32>
    %63 = vector.broadcast %62 : vector<8x1xf32> to vector<8x8xf32>
    %64 = arith.subf %60, %63 : vector<8x8xf32>
    %65 = math.exp %64 : vector<8x8xf32>
    %cst_35 = arith.constant dense<0.000000e+00> : vector<8xf32>
    %66 = vector.multi_reduction <add>, %65, %cst_35 [1] : vector<8x8xf32> to vector<8xf32>
    %67 = vector.shape_cast %66 : vector<8xf32> to vector<8x1xf32>
    %cst_36 = arith.constant dense<0.000000e+00> : vector<8x16xf32>
    %68 = tpu.matmul %65, %59, %cst_36 {dimension_numbers = #tpu.dot_dimension_numbers<[1], [0], [0], [1], [0, 0, 1, 1], [], []>} : vector<8x8xf32>, vector<8x16xf32>, vector<8x16xf32> -> vector<8x16xf32>
    %69 = tpu.reciprocal %67 : vector<8x1xf32> -> vector<8x1xf32>
    %70 = vector.broadcast %69 : vector<8x1xf32> to vector<8x16xf32>
    %71 = arith.mulf %68, %70 : vector<8x16xf32>
    %c0_37 = arith.constant 0 : index
    %c0_38 = arith.constant 0 : index
    %c32 = arith.constant 32 : index
    %72 = vector.load %arg9[%c0_37, %c0_38, %c32] : memref<1x8x64xf32, #tpu.memory_space<vmem>>, vector<1x8x16xf32>
    %73 = vector.shape_cast %72 : vector<1x8x16xf32> to vector<8x16xf32>
    %74 = vector.shape_cast %71 : vector<8x16xf32> to vector<1x8x16xf32>
    tpu.vector_store %arg9[%c0_37, %c0_38, %c32], %74 {strides = array<i32>} : memref<1x8x64xf32, #tpu.memory_space<vmem>>, vector<1x8x16xf32>,
    %75 = vector.extract_strided_slice %10 {offsets = [0, 48], sizes = [8, 16], strides = [1, 1]} : vector<8x64xf32> to vector<8x16xf32>
    %76 = vector.extract_strided_slice %15 {offsets = [0, 48], sizes = [8, 16], strides = [1, 1]} : vector<8x64xf32> to vector<8x16xf32>
    %77 = vector.extract_strided_slice %20 {offsets = [0, 48], sizes = [8, 16], strides = [1, 1]} : vector<8x64xf32> to vector<8x16xf32>
    %cst_39 = arith.constant dense<0.000000e+00> : vector<8x8xf32>
    %78 = tpu.matmul %75, %76, %cst_39 {dimension_numbers = #tpu.dot_dimension_numbers<[1], [1], [0], [0], [0, 0, 1, 0], [], []>} : vector<8x16xf32>, vector<8x16xf32>, vector<8x8xf32> -> vector<8x8xf32>
    %cst_40 = arith.constant dense<0xFF800000> : vector<8xf32>
    %79 = vector.multi_reduction <maximumf>, %78, %cst_40 [1] : vector<8x8xf32> to vector<8xf32>
    %80 = vector.shape_cast %79 : vector<8xf32> to vector<8x1xf32>
    %81 = vector.broadcast %80 : vector<8x1xf32> to vector<8x8xf32>
    %82 = arith.subf %78, %81 : vector<8x8xf32>
    %83 = math.exp %82 : vector<8x8xf32>
    %cst_41 = arith.constant dense<0.000000e+00> : vector<8xf32>
    %84 = vector.multi_reduction <add>, %83, %cst_41 [1] : vector<8x8xf32> to vector<8xf32>
    %85 = vector.shape_cast %84 : vector<8xf32> to vector<8x1xf32>
    %cst_42 = arith.constant dense<0.000000e+00> : vector<8x16xf32>
    %86 = tpu.matmul %83, %77, %cst_42 {dimension_numbers = #tpu.dot_dimension_numbers<[1], [0], [0], [1], [0, 0, 1, 1], [], []>} : vector<8x8xf32>, vector<8x16xf32>, vector<8x16xf32> -> vector<8x16xf32>
    %87 = tpu.reciprocal %85 : vector<8x1xf32> -> vector<8x1xf32>
    %88 = vector.broadcast %87 : vector<8x1xf32> to vector<8x16xf32>
    %89 = arith.mulf %86, %88 : vector<8x16xf32>
    %c0_43 = arith.constant 0 : index
    %c0_44 = arith.constant 0 : index
    %c48 = arith.constant 48 : index
    %90 = vector.load %arg9[%c0_43, %c0_44, %c48] : memref<1x8x64xf32, #tpu.memory_space<vmem>>, vector<1x8x16xf32>
    %91 = vector.shape_cast %90 : vector<1x8x16xf32> to vector<8x16xf32>
    %92 = vector.shape_cast %89 : vector<8x16xf32> to vector<1x8x16xf32>
    tpu.vector_store %arg9[%c0_43, %c0_44, %c48], %92 {strides = array<i32>} : memref<1x8x64xf32, #tpu.memory_space<vmem>>, vector<1x8x16xf32>,
    return
  }
  func.func @transform_0(%arg0: i32) -> (i32, i32, i32) {
    %c0_i32 = arith.constant 0 : i32
    %c0_i32_0 = arith.constant 0 : i32
    %c0_i32_1 = arith.constant 0 : i32
    return %arg0, %c0_i32, %c0_i32_0 : i32, i32, i32
  }
  func.func @transform_1(%arg0: i32) -> (i32, i32, i32) {
    %c0_i32 = arith.constant 0 : i32
    %c0_i32_0 = arith.constant 0 : i32
    %c0_i32_1 = arith.constant 0 : i32
    return %arg0, %c0_i32, %c0_i32_0 : i32, i32, i32
  }
  func.func @transform_2(%arg0: i32) -> (i32, i32) {
    %c0_i32 = arith.constant 0 : i32
    %c0_i32_0 = arith.constant 0 : i32
    %c0_i32_1 = arith.constant 0 : i32
    return %c0_i32, %c0_i32_0 : i32, i32
  }
  func.func @transform_3(%arg0: i32) -> (i32, i32) {
    %c0_i32 = arith.constant 0 : i32
    %c0_i32_0 = arith.constant 0 : i32
    %c0_i32_1 = arith.constant 0 : i32
    return %c0_i32, %c0_i32_0 : i32, i32
  }
  func.func @transform_4(%arg0: i32) -> (i32, i32) {
    %c0_i32 = arith.constant 0 : i32
    %c0_i32_0 = arith.constant 0 : i32
    %c0_i32_1 = arith.constant 0 : i32
    return %c0_i32, %c0_i32_0 : i32, i32
  }
  func.func @transform_5(%arg0: i32) -> (i32, i32) {
    %c0_i32 = arith.constant 0 : i32
    %c0_i32_0 = arith.constant 0 : i32
    %c0_i32_1 = arith.constant 0 : i32
    return %c0_i32, %c0_i32_0 : i32, i32
  }
  func.func @transform_6(%arg0: i32) -> (i32, i32) {
    %c0_i32 = arith.constant 0 : i32
    %c0_i32_0 = arith.constant 0 : i32
    %c0_i32_1 = arith.constant 0 : i32
    return %c0_i32, %c0_i32_0 : i32, i32
  }
  func.func @transform_7(%arg0: i32) -> (i32, i32) {
    %c0_i32 = arith.constant 0 : i32
    %c0_i32_0 = arith.constant 0 : i32
    %c0_i32_1 = arith.constant 0 : i32
    return %c0_i32, %c0_i32_0 : i32, i32
  }
  func.func @transform_8(%arg0: i32) -> (i32, i32, i32) {
    %c0_i32 = arith.constant 0 : i32
    %c0_i32_0 = arith.constant 0 : i32
    %c0_i32_1 = arith.constant 0 : i32
    return %arg0, %c0_i32, %c0_i32_0 : i32, i32, i32
  }
}

</mosaic_0001>

<llo_original>
// kernel: tpu_custom_call.1
$region0: #{tpu_custom_call.1}
  #allocation0 [shape = 'u32[]', space=smem, size = 0x4, offset = 0x4, fixed_abs, tag = 'smem constant byte address 0x4 - core index']
  #allocation1 [shape = 'u32[72,128]{1,0:T(1,128)}', space=vmem, size = 0x9000, scoped, tag = 'internal scratch']
  %s0 = inlined_call_operand.hbm [shape: f32[2,8,32], index: 0, kind: input, shape index: {}]
  %s1 = inlined_call_operand.hbm [shape: f32[2,8,32], index: 1, kind: input, shape index: {}]
  %s2 = inlined_call_operand.hbm [shape: f32[32,64], index: 2, kind: input, shape index: {}]
  %s3 = inlined_call_operand.vmem [shape: f32[1,64], index: 3, kind: input, shape index: {}]
  %s4 = inlined_call_operand.hbm [shape: f32[32,64], index: 4, kind: input, shape index: {}]
  %s5 = inlined_call_operand.vmem [shape: f32[1,64], index: 5, kind: input, shape index: {}]
  %s6 = inlined_call_operand.hbm [shape: f32[32,64], index: 6, kind: input, shape index: {}]
  %s7 = inlined_call_operand.vmem [shape: f32[1,64], index: 7, kind: input, shape index: {}]
  %s8 = inlined_call_operand.hbm [shape: f32[2,8,64], index: 8, kind: output, shape index: {}]
  %s9 = sld [smem:[#allocation0]]
  $region85: #{tpu_custom_call.1} parent=0
    _
  %s11 = ssub.s32 1, %s9
  %s12 = scalar_select 0, %s11, %s9
  $region1: #{tpu_custom_call.1} parent=0
    #allocation2 [shape = 'u8[8192]{0}', space=vmem, size = 0x2000, scoped, tag = 'input window, operand 0']
    #allocation3 [shape = 's32[2]{0}', space=sflag, size = 0x8, scoped, tag = 'scoped memory for tpu_custom_call.1']
    #allocation4 [shape = 's32[2]{0}', space=sflag, size = 0x8, scoped, tag = 'scoped memory for tpu_custom_call.1']
    #allocation5 [shape = 'u8[8192]{0}', space=vmem, size = 0x2000, scoped, tag = 'input window, operand 1']
    #allocation6 [shape = 's32[2]{0}', space=sflag, size = 0x8, scoped, tag = 'scoped memory for tpu_custom_call.1']
    #allocation7 [shape = 'u8[16384]{0}', space=vmem, size = 0x4000, scoped, tag = 'input window, operand 2, single buffered']
    #allocation8 [shape = 'u8[16384]{0}', space=vmem, size = 0x4000, scoped, tag = 'input window, operand 4, single buffered']
    #allocation9 [shape = 's32[1]{0}', space=sflag, size = 0x4, scoped, tag = 'scoped memory for tpu_custom_call.1']
    #allocation10 [shape = 'u8[16384]{0}', space=vmem, size = 0x4000, scoped, tag = 'input window, operand 6, single buffered']
    #allocation11 [shape = 'u8[8192]{0}', space=vmem, size = 0x2000, scoped, tag = 'output window, operand 0']
    %13 = vsyncpa [#allocation3], 0
    %s14 = scalar_lea.sflag [#allocation3], 1
    %15 = vsyncpa %s14, 0
    %16 = vsyncpa [#allocation6], 0
    %s17 = scalar_lea.sflag [#allocation6], 1
    %18 = vsyncpa %s17, 0
    %19 = vsyncpa [#allocation9], 0
    %20 = vsyncpa [#allocation4], 0
    %s21 = scalar_lea.sflag [#allocation4], 1
    %22 = vsyncpa %s21, 0
    loop: start=0, step=1, limit=4
    $region2: #{tpu_custom_call.1} parent=1 // loop_pre_header
      _
    $region3: #{tpu_custom_call.1} parent=1 // loop_header
      %s24 = sphi 0, %s28
      %p25 = scmp.ge.s32.totalorder %s24, 4
      %s34 = sphi 0, %s36
      %s37 = sphi 0, %s34
      %s38 = sphi 0, %s37
      %s54 = sphi 0, %s38
      %s60 = sphi 0, %s62
      %s63 = sphi 0, %s60
      %s64 = sphi 0, %s63
      %s80 = sphi 0, %s64
      %s84 = sphi 0, %s84
      %s86 = sphi 0, %s84
      %s87 = sphi 0, %s86
      %s101 = sphi 0, %s87
      %s105 = sphi 0, %s105
      %s107 = sphi 0, %s105
      %s108 = sphi 0, %s107
      %s122 = sphi 0, %s108
      %s126 = sphi 0, %s126
      %s128 = sphi 0, %s126
      %s129 = sphi 0, %s128
      %s143 = sphi 0, %s129
      %s147 = sphi 0, %s147
      %s149 = sphi 0, %s147
      %s150 = sphi 0, %s149
      %s164 = sphi 0, %s150
      %s168 = sphi 0, %s168
      %s170 = sphi 0, %s168
      %s171 = sphi 0, %s170
      %s185 = sphi 0, %s171
      %s189 = sphi 0, %s189
      %s191 = sphi 0, %s189
      %s192 = sphi 0, %s191
      %s206 = sphi 0, %s192
      %s212 = sphi 0, %s214
      %s215 = sphi 0, %s212
      %s216 = sphi 0, %s215
      %s232 = sphi 0, %s216
    $region4: #{tpu_custom_call.1} parent=1 // loop_header_branch
      %27 = sbr.rel (%p25) target = $region8
    $region5: #{tpu_custom_call.1} parent=1 // loop_body
      %s29 = ssub.s32 %s24, 1
      %s30 = ssub.s32 %s24, 2
      %s31 = sadd.s32 %s24, 1
      %s32 = ssub.s32 %s24, %s31
      %p33 = scmp.eq.s32.totalorder %s32, 0
      %s35 = sadd.s32 %s34, 1
      %s36 = scalar_select %p33, %s34, %s35
      %p39 = pneg %p33
      %p40 = scmp.eq.s32.totalorder %s24, 1
      %p41 = por %p39, %p40
      %p42 = scmp.ne.s32.totalorder %s34, %s37
      %p43 = scmp.eq.s32.totalorder %s24, 0
      %p44 = por %p42, %p43
      %p45 = scmp.ne.s32.totalorder %s34, %s37
      %p46 = scmp.eq.s32.totalorder %s29, 1
      %p47 = por %p45, %p46
      %p48 = scmp.ne.s32.totalorder %s37, %s38
      %p49 = scmp.eq.s32.totalorder %s29, 0
      %p50 = por %p48, %p49
      %p51 = scmp.ne.s32.totalorder %s37, %s38
      %p52 = scmp.eq.s32.totalorder %s30, 1
      %p53 = por %p51, %p52
      %p55 = scmp.ne.s32.totalorder %s38, %s54
      %p56 = scmp.eq.s32.totalorder %s30, 0
      %p57 = por %p55, %p56
      %s58 = ssub.s32 %s24, %s31
      %p59 = scmp.eq.s32.totalorder %s58, 0
      %s61 = sadd.s32 %s60, 1
      %s62 = scalar_select %p59, %s60, %s61
      %p65 = pneg %p59
      %p66 = scmp.eq.s32.totalorder %s24, 1
      %p67 = por %p65, %p66
      %p68 = scmp.ne.s32.totalorder %s60, %s63
      %p69 = scmp.eq.s32.totalorder %s24, 0
      %p70 = por %p68, %p69
      %p71 = scmp.ne.s32.totalorder %s60, %s63
      %p72 = scmp.eq.s32.totalorder %s29, 1
      %p73 = por %p71, %p72
      %p74 = scmp.ne.s32.totalorder %s63, %s64
      %p75 = scmp.eq.s32.totalorder %s29, 0
      %p76 = por %p74, %p75
      %p77 = scmp.ne.s32.totalorder %s63, %s64
      %p78 = scmp.eq.s32.totalorder %s30, 1
      %p79 = por %p77, %p78
      %p81 = scmp.ne.s32.totalorder %s64, %s80
      %p82 = scmp.eq.s32.totalorder %s30, 0
      %p83 = por %p81, %p82
      %s85 = sadd.s32 %s84, 1
      %p88 = scmp.eq.s32.totalorder %s24, 1
      %p89 = scmp.ne.s32.totalorder %s84, %s86
      %p90 = scmp.eq.s32.totalorder %s24, 0
      %p91 = por %p89, %p90
      %p92 = scmp.ne.s32.totalorder %s84, %s86
      %p93 = scmp.eq.s32.totalorder %s29, 1
      %p94 = por %p92, %p93
      %p95 = scmp.ne.s32.totalorder %s86, %s87
      %p96 = scmp.eq.s32.totalorder %s29, 0
      %p97 = por %p95, %p96
      %p98 = scmp.ne.s32.totalorder %s86, %s87
      %p99 = scmp.eq.s32.totalorder %s30, 1
      %p100 = por %p98, %p99
      %p102 = scmp.ne.s32.totalorder %s87, %s101
      %p103 = scmp.eq.s32.totalorder %s30, 0
      %p104 = por %p102, %p103
      %s106 = sadd.s32 %s105, 1
      %p109 = scmp.eq.s32.totalorder %s24, 1
      %p110 = scmp.ne.s32.totalorder %s105, %s107
      %p111 = scmp.eq.s32.totalorder %s24, 0
      %p112 = por %p110, %p111
      %p113 = scmp.ne.s32.totalorder %s105, %s107
      %p114 = scmp.eq.s32.totalorder %s29, 1
      %p115 = por %p113, %p114
      %p116 = scmp.ne.s32.totalorder %s107, %s108
      %p117 = scmp.eq.s32.totalorder %s29, 0
      %p118 = por %p116, %p117
      %p119 = scmp.ne.s32.totalorder %s107, %s108
      %p120 = scmp.eq.s32.totalorder %s30, 1
      %p121 = por %p119, %p120
      %p123 = scmp.ne.s32.totalorder %s108, %s122
      %p124 = scmp.eq.s32.totalorder %s30, 0
      %p125 = por %p123, %p124
      %s127 = sadd.s32 %s126, 1
      %p130 = scmp.eq.s32.totalorder %s24, 1
      %p131 = scmp.ne.s32.totalorder %s126, %s128
      %p132 = scmp.eq.s32.totalorder %s24, 0
      %p133 = por %p131, %p132
      %p134 = scmp.ne.s32.totalorder %s126, %s128
      %p135 = scmp.eq.s32.totalorder %s29, 1
      %p136 = por %p134, %p135
      %p137 = scmp.ne.s32.totalorder %s128, %s129
      %p138 = scmp.eq.s32.totalorder %s29, 0
      %p139 = por %p137, %p138
      %p140 = scmp.ne.s32.totalorder %s128, %s129
      %p141 = scmp.eq.s32.totalorder %s30, 1
      %p142 = por %p140, %p141
      %p144 = scmp.ne.s32.totalorder %s129, %s143
      %p145 = scmp.eq.s32.totalorder %s30, 0
      %p146 = por %p144, %p145
      %s148 = sadd.s32 %s147, 1
      %p151 = scmp.eq.s32.totalorder %s24, 1
      %p152 = scmp.ne.s32.totalorder %s147, %s149
      %p153 = scmp.eq.s32.totalorder %s24, 0
      %p154 = por %p152, %p153
      %p155 = scmp.ne.s32.totalorder %s147, %s149
      %p156 = scmp.eq.s32.totalorder %s29, 1
      %p157 = por %p155, %p156
      %p158 = scmp.ne.s32.totalorder %s149, %s150
      %p159 = scmp.eq.s32.totalorder %s29, 0
      %p160 = por %p158, %p159
      %p161 = scmp.ne.s32.totalorder %s149, %s150
      %p162 = scmp.eq.s32.totalorder %s30, 1
      %p163 = por %p161, %p162
      %p165 = scmp.ne.s32.totalorder %s150, %s164
      %p166 = scmp.eq.s32.totalorder %s30, 0
      %p167 = por %p165, %p166
      %s169 = sadd.s32 %s168, 1
      %p172 = scmp.eq.s32.totalorder %s24, 1
      %p173 = scmp.ne.s32.totalorder %s168, %s170
      %p174 = scmp.eq.s32.totalorder %s24, 0
      %p175 = por %p173, %p174
      %p176 = scmp.ne.s32.totalorder %s168, %s170
      %p177 = scmp.eq.s32.totalorder %s29, 1
      %p178 = por %p176, %p177
      %p179 = scmp.ne.s32.totalorder %s170, %s171
      %p180 = scmp.eq.s32.totalorder %s29, 0
      %p181 = por %p179, %p180
      %p182 = scmp.ne.s32.totalorder %s170, %s171
      %p183 = scmp.eq.s32.totalorder %s30, 1
      %p184 = por %p182, %p183
      %p186 = scmp.ne.s32.totalorder %s171, %s185
      %p187 = scmp.eq.s32.totalorder %s30, 0
      %p188 = por %p186, %p187
      %s190 = sadd.s32 %s189, 1
      %p193 = scmp.eq.s32.totalorder %s24, 1
      %p194 = scmp.ne.s32.totalorder %s189, %s191
      %p195 = scmp.eq.s32.totalorder %s24, 0
      %p196 = por %p194, %p195
      %p197 = scmp.ne.s32.totalorder %s189, %s191
      %p198 = scmp.eq.s32.totalorder %s29, 1
      %p199 = por %p197, %p198
      %p200 = scmp.ne.s32.totalorder %s191, %s192
      %p201 = scmp.eq.s32.totalorder %s29, 0
      %p202 = por %p200, %p201
      %p203 = scmp.ne.s32.totalorder %s191, %s192
      %p204 = scmp.eq.s32.totalorder %s30, 1
      %p205 = por %p203, %p204
      %p207 = scmp.ne.s32.totalorder %s192, %s206
      %p208 = scmp.eq.s32.totalorder %s30, 0
      %p209 = por %p207, %p208
      %s210 = ssub.s32 %s24, %s31
      %p211 = scmp.eq.s32.totalorder %s210, 0
      %s213 = sadd.s32 %s212, 1
      %s214 = scalar_select %p211, %s212, %s213
      %p217 = pneg %p211
      %p218 = scmp.eq.s32.totalorder %s24, 1
      %p219 = por %p217, %p218
      %p220 = scmp.ne.s32.totalorder %s212, %s215
      %p221 = scmp.eq.s32.totalorder %s24, 0
      %p222 = por %p220, %p221
      %p223 = scmp.ne.s32.totalorder %s212, %s215
      %p224 = scmp.eq.s32.totalorder %s29, 1
      %p225 = por %p223, %p224
      %p226 = scmp.ne.s32.totalorder %s215, %s216
      %p227 = scmp.eq.s32.totalorder %s29, 0
      %p228 = por %p226, %p227
      %p229 = scmp.ne.s32.totalorder %s215, %s216
      %p230 = scmp.eq.s32.totalorder %s30, 1
      %p231 = por %p229, %p230
      %p233 = scmp.ne.s32.totalorder %s216, %s232
      %p234 = scmp.eq.s32.totalorder %s30, 0
      %p235 = por %p233, %p234
      %p236 = scmp.le.s32.totalorder 1, %s24
      %p237 = scmp.lt.s32.totalorder %s24, 3
      %p238 = pnand %p236, %p237
      %p239 = pneg %p238
      // Predicated region
      $region9: #{tpu_custom_call.1} parent=5 // pred_check
        _
      $region10: #{tpu_custom_call.1} parent=5 // pred_check_branch
        %241 = sbr.rel (%p238) target = $region12
      $region11: #{tpu_custom_call.1} parent=5 // pred_region
        %s242 = ssub.s32 %s24, 1
        // Predicated region
        $region13: #{tpu_custom_call.1} parent=11 // pred_check
          %p243 = pneg %p97
        $region14: #{tpu_custom_call.1} parent=11 // pred_check_branch
          %245 = sbr.rel (%p243) target = $region16
        $region15: #{tpu_custom_call.1} parent=11 // pred_region
          %247 = vsyncadd [#allocation6], 0
          %s248 = sshll.u32 %s2, 4
          %s249 = int_to_ptr.hbm [resolvable:$true] %s248
          %s250 = sshll.u32 [#allocation7], 4
          %s251 = int_to_ptr.vmem [resolvable:$true] %s250
          %256 = dma.hbm_to_vmem [thread:$0]  %s249, 512, %s251, [#allocation6], 128, 128, 8
        $region16: #{tpu_custom_call.1} parent=11 // pred_fallthru
          _
        // Predicated region
        $region17: #{tpu_custom_call.1} parent=11 // pred_check
          %p257 = pneg %p118
        $region18: #{tpu_custom_call.1} parent=11 // pred_check_branch
          %259 = sbr.rel (%p257) target = $region20
        $region19: #{tpu_custom_call.1} parent=11 // pred_region
          _
        $region20: #{tpu_custom_call.1} parent=11 // pred_fallthru
          _
        // Predicated region
        $region21: #{tpu_custom_call.1} parent=11 // pred_check
          %p260 = pneg %p139
        $region22: #{tpu_custom_call.1} parent=11 // pred_check_branch
          %262 = sbr.rel (%p260) target = $region24
        $region23: #{tpu_custom_call.1} parent=11 // pred_region
          %264 = vsyncadd [#allocation9], 0
          %s265 = sshll.u32 %s4, 4
          %s266 = int_to_ptr.hbm [resolvable:$true] %s265
          %s267 = sshll.u32 [#allocation8], 4
          %s268 = int_to_ptr.vmem [resolvable:$true] %s267
          %273 = dma.hbm_to_vmem [thread:$0]  %s266, 512, %s268, [#allocation9], 128, 128, 8
        $region24: #{tpu_custom_call.1} parent=11 // pred_fallthru
          _
        // Predicated region
        $region25: #{tpu_custom_call.1} parent=11 // pred_check
          %p274 = pneg %p160
        $region26: #{tpu_custom_call.1} parent=11 // pred_check_branch
          %276 = sbr.rel (%p274) target = $region28
        $region27: #{tpu_custom_call.1} parent=11 // pred_region
          _
        $region28: #{tpu_custom_call.1} parent=11 // pred_fallthru
          _
        // Predicated region
        $region29: #{tpu_custom_call.1} parent=11 // pred_check
          %p277 = pneg %p181
        $region30: #{tpu_custom_call.1} parent=11 // pred_check_branch
          %279 = sbr.rel (%p277) target = $region32
        $region31: #{tpu_custom_call.1} parent=11 // pred_region
          %281 = vsyncadd [#allocation9], 0
          %s282 = sshll.u32 %s6, 4
          %s283 = int_to_ptr.hbm [resolvable:$true] %s282
          %s284 = sshll.u32 [#allocation10], 4
          %s285 = int_to_ptr.vmem [resolvable:$true] %s284
          %290 = dma.hbm_to_vmem [thread:$0]  %s283, 512, %s285, [#allocation9], 128, 128, 8
        $region32: #{tpu_custom_call.1} parent=11 // pred_fallthru
          _
        // Predicated region
        $region33: #{tpu_custom_call.1} parent=11 // pred_check
          %p291 = pneg %p202
        $region34: #{tpu_custom_call.1} parent=11 // pred_check_branch
          %293 = sbr.rel (%p291) target = $region36
        $region35: #{tpu_custom_call.1} parent=11 // pred_region
          _
        $region36: #{tpu_custom_call.1} parent=11 // pred_fallthru
          _
      $region12: #{tpu_custom_call.1} parent=5 // pred_fallthru
        _
      %p294 = scmp.lt.s32.totalorder %s24, 2
      // Predicated region
      $region37: #{tpu_custom_call.1} parent=5 // pred_check
        %p295 = pneg %p294
      $region38: #{tpu_custom_call.1} parent=5 // pred_check_branch
        %297 = sbr.rel (%p295) target = $region40
      $region39: #{tpu_custom_call.1} parent=5 // pred_region
        // Predicated region
        $region41: #{tpu_custom_call.1} parent=39 // pred_check
          %p298 = pneg %p44
        $region42: #{tpu_custom_call.1} parent=39 // pred_check_branch
          %300 = sbr.rel (%p298) target = $region44
        $region43: #{tpu_custom_call.1} parent=39 // pred_region
          %s301 = sand.u32 %s34, 1
          %s302 = scalar_lea.sflag [#allocation3], %s301
          %s303 = sand.u32 %s34, 1
          %s304 = smul.addr %s303, 8
          %s305 = scalar_lea.vmem [#allocation2], %s304
          %307 = vsyncadd %s302, 0
          %s308 = smul.addr %s24, 8
          %s309 = scalar_lea.hbm %s0, %s308
          %s311 = sshll.u32 %s309, 4
          %s312 = int_to_ptr.hbm [resolvable:$true] %s311
          %s313 = sshll.u32 %s305, 4
          %s314 = int_to_ptr.vmem [resolvable:$true] %s313
          %316 = dma.hbm_to_vmem [thread:$0]  %s312, 128, %s314, %s302
        $region44: #{tpu_custom_call.1} parent=39 // pred_fallthru
          _
        // Predicated region
        $region45: #{tpu_custom_call.1} parent=39 // pred_check
          %p317 = pneg %p70
        $region46: #{tpu_custom_call.1} parent=39 // pred_check_branch
          %319 = sbr.rel (%p317) target = $region48
        $region47: #{tpu_custom_call.1} parent=39 // pred_region
          %s320 = sand.u32 %s24, 1
          %s321 = scalar_lea.sflag [#allocation6], %s320
          %s322 = sand.u32 %s60, 1
          %s323 = smul.addr %s322, 8
          %s324 = scalar_lea.vmem [#allocation5], %s323
          %326 = vsyncadd %s321, 0
          %s327 = smul.addr %s24, 8
          %s328 = scalar_lea.hbm %s1, %s327
          %s330 = sshll.u32 %s328, 4
          %s331 = int_to_ptr.hbm [resolvable:$true] %s330
          %s332 = sshll.u32 %s324, 4
          %s333 = int_to_ptr.vmem [resolvable:$true] %s332
          %335 = dma.hbm_to_vmem [thread:$0]  %s331, 128, %s333, %s321
        $region48: #{tpu_custom_call.1} parent=39 // pred_fallthru
          _
      $region40: #{tpu_custom_call.1} parent=5 // pred_fallthru
        _
      %p336 = scmp.le.s32.totalorder 1, %s24
      %p337 = scmp.lt.s32.totalorder %s24, 3
      %p338 = pnand %p336, %p337
      %p339 = pneg %p338
      // Predicated region
      $region49: #{tpu_custom_call.1} parent=5 // pred_check
        _
      $region50: #{tpu_custom_call.1} parent=5 // pred_check_branch
        %341 = sbr.rel (%p338) target = $region52
      $region51: #{tpu_custom_call.1} parent=5 // pred_region
        %s342 = ssub.s32 %s24, 1
        %s343 = sand.u32 %s37, 1
        %s344 = scalar_lea.sflag [#allocation3], %s343
        %s345 = sand.u32 %s37, 1
        %s346 = smul.addr %s345, 8
        %s347 = scalar_lea.vmem [#allocation2], %s346
        // Predicated region
        $region53: #{tpu_custom_call.1} parent=51 // pred_check
          %p348 = pneg %p50
        $region54: #{tpu_custom_call.1} parent=51 // pred_check_branch
          %350 = sbr.rel (%p348) target = $region56
        $region55: #{tpu_custom_call.1} parent=51 // pred_region
          %352 = dma.done %s344, 128
        $region56: #{tpu_custom_call.1} parent=51 // pred_fallthru
          _
        %s353 = sand.u32 %s29, 1
        %s354 = scalar_lea.sflag [#allocation6], %s353
        %s355 = sand.u32 %s63, 1
        %s356 = smul.addr %s355, 8
        %s357 = scalar_lea.vmem [#allocation5], %s356
        // Predicated region
        $region57: #{tpu_custom_call.1} parent=51 // pred_check
          %p358 = pneg %p76
        $region58: #{tpu_custom_call.1} parent=51 // pred_check_branch
          %360 = sbr.rel (%p358) target = $region60
        $region59: #{tpu_custom_call.1} parent=51 // pred_region
          %362 = dma.done %s354, 128
        $region60: #{tpu_custom_call.1} parent=51 // pred_fallthru
          _
        // Predicated region
        $region61: #{tpu_custom_call.1} parent=51 // pred_check
          %p363 = pneg %p97
        $region62: #{tpu_custom_call.1} parent=51 // pred_check_branch
          %365 = sbr.rel (%p363) target = $region64
        $region63: #{tpu_custom_call.1} parent=51 // pred_region
          %367 = dma.done [#allocation6], 512
        $region64: #{tpu_custom_call.1} parent=51 // pred_fallthru
          _
        // Predicated region
        $region65: #{tpu_custom_call.1} parent=51 // pred_check
          %p368 = pneg %p139
        $region66: #{tpu_custom_call.1} parent=51 // pred_check_branch
          %370 = sbr.rel (%p368) target = $region68
        $region67: #{tpu_custom_call.1} parent=51 // pred_region
          %372 = dma.done [#allocation9], 512
        $region68: #{tpu_custom_call.1} parent=51 // pred_fallthru
          _
        // Predicated region
        $region69: #{tpu_custom_call.1} parent=51 // pred_check
          %p373 = pneg %p181
        $region70: #{tpu_custom_call.1} parent=51 // pred_check_branch
          %375 = sbr.rel (%p373) target = $region72
        $region71: #{tpu_custom_call.1} parent=51 // pred_region
          %377 = dma.done [#allocation9], 512
        $region72: #{tpu_custom_call.1} parent=51 // pred_fallthru
          _
        %s378 = sand.u32 %s37, 1
        %s379 = scalar_lea.sflag [#allocation3], %s378
        %s380 = sand.u32 %s37, 1
        %s381 = smul.addr %s380, 8
        %s382 = scalar_lea.vmem [#allocation2], %s381
        %p383 = pneg %p50
        %p384 = pneg %p47
        %s385 = sand.u32 %s29, 1
        %s386 = scalar_lea.sflag [#allocation6], %s385
        %s387 = sand.u32 %s63, 1
        %s388 = smul.addr %s387, 8
        %s389 = scalar_lea.vmem [#allocation5], %s388
        %p390 = pneg %p76
        %p391 = pneg %p73
        %p392 = pneg %p97
        %p393 = pneg %p94
        %p394 = pneg %p118
        %p395 = pneg %p115
        %p396 = pneg %p139
        %p397 = pneg %p136
        %p398 = pneg %p160
        %p399 = pneg %p157
        %p400 = pneg %p181
        %p401 = pneg %p178
        %p402 = pneg %p202
        %p403 = pneg %p199
        %p404 = pneg %p228
        %p405 = pneg %p225
        %s406 = sand.u32 %s215, 1
        %s407 = scalar_lea.sflag [#allocation4], %s406
        %s408 = sand.u32 %s215, 1
        %s409 = smul.addr %s408, 8
        %s410 = scalar_lea.vmem [#allocation11], %s409
        %v411 = vld [vmem:[%s347] sm:$0xff]
        %v412 = vld [vmem:[%s357] sm:$0xff]
        %v413 = vld [vmem:[#allocation7] sm:$0xff]
        %v414 = vld [vmem:[#allocation7 + $0x8] sm:$0xff]
        %v415 = vld [vmem:[#allocation7 + $0x10] sm:$0xff]
        %v416 = vld [vmem:[#allocation7 + $0x18] sm:$0xff]
        %v417 = vld [vmem:[%s3] sm:$0x1]
        %v419 = vperm.slane %v417, 0
        %vm421 = vcmask 261120
        %v423 = vsel %vm421, %v411, 0
        %425 = vmatpush.msra.mxu0 0.0
        %426 = vmatpush.msra.mxu0 0.0
        %427 = vmatpush.msra.mxu0 0.0
        %428 = vmatpush.msra.mxu0 0.0
        %429 = vmatpush.msra.mxu0 0.0
        %430 = vmatpush.msra.mxu0 0.0
        %431 = vmatpush.msra.mxu0 0.0
        %432 = vmatpush.msra.mxu0 0.0
        %433 = vmatpush.msra.mxu0 0.0
        %434 = vmatpush.msra.mxu0 0.0
        %435 = vmatpush.msra.mxu0 0.0
        %436 = vmatpush.msra.mxu0 0.0
        %437 = vmatpush.msra.mxu0 %v416
        %438 = vmatpush.msra.mxu0 %v415
        %439 = vmatpush.msra.mxu0 %v414
        %440 = vmatpush.msra.mxu0 %v413
        %441 = vmatmul.f32.gmra.mxu0 %v423
        %v442 = vpop.f32.mrf.mxu0
        %v443 = vadd.f32 %v419, %v442
        %444 = vdwg.mxu0
        %v445 = vmul.f32 %v443, 0.25
        %v446 = vld [vmem:[#allocation8] sm:$0xff]
        %v447 = vld [vmem:[#allocation8 + $0x8] sm:$0xff]
        %v448 = vld [vmem:[#allocation8 + $0x10] sm:$0xff]
        %v449 = vld [vmem:[#allocation8 + $0x18] sm:$0xff]
        %v450 = vld [vmem:[%s5] sm:$0x1]
        %v452 = vperm.slane %v450, 0
        %v455 = vsel %vm421, %v412, 0
        %457 = vmatpush.msra.mxu0 0.0
        %458 = vmatpush.msra.mxu0 0.0
        %459 = vmatpush.msra.mxu0 0.0
        %460 = vmatpush.msra.mxu0 0.0
        %461 = vmatpush.msra.mxu0 0.0
        %462 = vmatpush.msra.mxu0 0.0
        %463 = vmatpush.msra.mxu0 0.0
        %464 = vmatpush.msra.mxu0 0.0
        %465 = vmatpush.msra.mxu0 0.0
        %466 = vmatpush.msra.mxu0 0.0
        %467 = vmatpush.msra.mxu0 0.0
        %468 = vmatpush.msra.mxu0 0.0
        %469 = vmatpush.msra.mxu0 %v449
        %470 = vmatpush.msra.mxu0 %v448
        %471 = vmatpush.msra.mxu0 %v447
        %472 = vmatpush.msra.mxu0 %v446
        %473 = vmatmul.f32.gmra.mxu0 %v455
        %v474 = vpop.f32.mrf.mxu0
        %v475 = vadd.f32 %v452, %v474
        %476 = vdwg.mxu0
        %v477 = vld [vmem:[#allocation10] sm:$0xff]
        %v478 = vld [vmem:[#allocation10 + $0x8] sm:$0xff]
        %v479 = vld [vmem:[#allocation10 + $0x10] sm:$0xff]
        %v480 = vld [vmem:[#allocation10 + $0x18] sm:$0xff]
        %v481 = vld [vmem:[%s7] sm:$0x1]
        %v483 = vperm.slane %v481, 0
        %485 = vmatpush.msra.mxu0 0.0
        %486 = vmatpush.msra.mxu0 0.0
        %487 = vmatpush.msra.mxu0 0.0
        %488 = vmatpush.msra.mxu0 0.0
        %489 = vmatpush.msra.mxu0 0.0
        %490 = vmatpush.msra.mxu0 0.0
        %491 = vmatpush.msra.mxu0 0.0
        %492 = vmatpush.msra.mxu0 0.0
        %493 = vmatpush.msra.mxu0 0.0
        %494 = vmatpush.msra.mxu0 0.0
        %495 = vmatpush.msra.mxu0 0.0
        %496 = vmatpush.msra.mxu0 0.0
        %497 = vmatpush.msra.mxu0 %v480
        %498 = vmatpush.msra.mxu0 %v479
        %499 = vmatpush.msra.mxu0 %v478
        %500 = vmatpush.msra.mxu0 %v477
        %501 = vmatmul.f32.gmra.mxu0 %v455
        %v502 = vpop.f32.mrf.mxu0
        %v503 = vadd.f32 %v483, %v502
        %504 = vdwg.mxu0
        %vm505 = vcmask 130048
        %v507 = vsel %vm505, %v445, 0
        %v510 = vsel %vm505, %v475, 0
        %512 = vmatpush.xpose.msra.mxu0 0.0
        %513 = vmatpush.xpose.msra.mxu0 0.0
        %514 = vmatpush.xpose.msra.mxu0 0.0
        %515 = vmatpush.xpose.msra.mxu0 0.0
        %516 = vmatpush.xpose.msra.mxu0 0.0
        %517 = vmatpush.xpose.msra.mxu0 0.0
        %518 = vmatpush.xpose.msra.mxu0 0.0
        %519 = vmatpush.xpose.msra.mxu0 0.0
        %520 = vmatpush.xpose.msra.mxu0 0.0
        %521 = vmatpush.xpose.msra.mxu0 0.0
        %522 = vmatpush.xpose.msra.mxu0 0.0
        %523 = vmatpush.xpose.msra.mxu0 0.0
        %524 = vmatpush.xpose.msra.mxu0 0.0
        %525 = vmatpush.xpose.msra.mxu0 0.0
        %526 = vmatpush.xpose.msra.mxu0 0.0
        %527 = vmatpush.xpose.msra.mxu0 %v510
        %528 = vmatmul.f32.gmra.mxu0 %v507
        %v529 = vpop.f32.mrf.mxu0
        %v530 = vadd.f32 0.0, %v529
        %531 = vdwg.mxu0
        %vm532 = vcmask 64512
        %v533 = vsel %vm532, %v530, -inf
        %534 = vmax.xlane.f32.xlu0 %v533
        %v535 = vpop.xlane.xlu0 %534
        %v536 = vsub.f32 %v530, %v535
        %v537 = vmul.f32 %v536, 1.442695
        %v538 = vpow.pop %v537
        %v539 = vsel %vm532, %v538, 0.0
        %540 = vadd.xlane.f32.xlu0 %v539
        %v541 = vpop.xlane.xlu0 %540
        %v543 = vsel %vm532, %v538, 0
        %545 = vmatpush.msra.mxu0 0.0
        %546 = vmatpush.msra.mxu0 0.0
        %547 = vmatpush.msra.mxu0 0.0
        %548 = vmatpush.msra.mxu0 0.0
        %549 = vmatpush.msra.mxu0 0.0
        %550 = vmatpush.msra.mxu0 0.0
        %551 = vmatpush.msra.mxu0 0.0
        %552 = vmatpush.msra.mxu0 0.0
        %553 = vmatpush.msra.mxu0 0.0
        %554 = vmatpush.msra.mxu0 0.0
        %555 = vmatpush.msra.mxu0 0.0
        %556 = vmatpush.msra.mxu0 0.0
        %557 = vmatpush.msra.mxu0 0.0
        %558 = vmatpush.msra.mxu0 0.0
        %559 = vmatpush.msra.mxu0 0.0
        %560 = vmatpush.msra.mxu0 %v503
        %561 = vmatmul.f32.gmra.mxu0 %v543
        %v562 = vpop.f32.mrf.mxu0
        %v563 = vadd.f32 0.0, %v562
        %564 = vdwg.mxu0
        %v565 = vrcp.pop %v541
        %v566 = vmul.f32 %v541, %v565
        %v567 = vsub.f32 1.0, %v566
        %v568 = vmul.f32 %v565, %v567
        %v569 = vadd.f32 %v565, %v568
        %vm570 = vweird.f32 %v541
        %vm571 = vweird.f32 %v565
        %vm572 = vmor %vm570, %vm571
        %v573 = vsel %vm572, %v565, %v569
        %v574 = vand.u32 2147483647, %v541
        %vm575 = vcmp.eq.f32.partialorder %v574, 8.507059e+37
        %v576 = vand.u32 %v541, 2147483648
        %v577 = vor.u32 1.1754944e-38, %v576
        %v578 = vsel %vm575, %v577, %v573
        %v579 = vmul.f32 %v563, %v578
        %580 = vst.msk [vmem:[%s410] sm:$0xff] %vm505, %v579
        %581 = vrot.lane.b32.xlu0 %v445, 112
        %v582 = vpop.permute.xlu0 %581
        %583 = vrot.lane.b32.xlu0 %v475, 112
        %v584 = vpop.permute.xlu0 %583
        %v585 = vsel %vm505, %v582, 0
        %v587 = vsel %vm505, %v584, 0
        %589 = vmatpush.xpose.msra.mxu0 0.0
        %590 = vmatpush.xpose.msra.mxu0 0.0
        %591 = vmatpush.xpose.msra.mxu0 0.0
        %592 = vmatpush.xpose.msra.mxu0 0.0
        %593 = vmatpush.xpose.msra.mxu0 0.0
        %594 = vmatpush.xpose.msra.mxu0 0.0
        %595 = vmatpush.xpose.msra.mxu0 0.0
        %596 = vmatpush.xpose.msra.mxu0 0.0
        %597 = vmatpush.xpose.msra.mxu0 0.0
        %598 = vmatpush.xpose.msra.mxu0 0.0
        %599 = vmatpush.xpose.msra.mxu0 0.0
        %600 = vmatpush.xpose.msra.mxu0 0.0
        %601 = vmatpush.xpose.msra.mxu0 0.0
        %602 = vmatpush.xpose.msra.mxu0 0.0
        %603 = vmatpush.xpose.msra.mxu0 0.0
        %604 = vmatpush.xpose.msra.mxu0 %v587
        %605 = vmatmul.f32.gmra.mxu0 %v585
        %v606 = vpop.f32.mrf.mxu0
        %v607 = vadd.f32 0.0, %v606
        %608 = vdwg.mxu0
        %v609 = vsel %vm532, %v607, -inf
        %610 = vmax.xlane.f32.xlu0 %v609
        %v611 = vpop.xlane.xlu0 %610
        %v612 = vsub.f32 %v607, %v611
        %v613 = vmul.f32 %v612, 1.442695
        %v614 = vpow.pop %v613
        %v615 = vsel %vm532, %v614, 0.0
        %616 = vadd.xlane.f32.xlu0 %v615
        %v617 = vpop.xlane.xlu0 %616
        %619 = vrot.lane.b32.xlu0 %v503, 112
        %v620 = vpop.permute.xlu0 %619
        %v623 = vsel %vm532, %v614, 0
        %625 = vmatpush.msra.mxu0 0.0
        %626 = vmatpush.msra.mxu0 0.0
        %627 = vmatpush.msra.mxu0 0.0
        %628 = vmatpush.msra.mxu0 0.0
        %629 = vmatpush.msra.mxu0 0.0
        %630 = vmatpush.msra.mxu0 0.0
        %631 = vmatpush.msra.mxu0 0.0
        %632 = vmatpush.msra.mxu0 0.0
        %633 = vmatpush.msra.mxu0 0.0
        %634 = vmatpush.msra.mxu0 0.0
        %635 = vmatpush.msra.mxu0 0.0
        %636 = vmatpush.msra.mxu0 0.0
        %637 = vmatpush.msra.mxu0 0.0
        %638 = vmatpush.msra.mxu0 0.0
        %639 = vmatpush.msra.mxu0 0.0
        %640 = vmatpush.msra.mxu0 %v620
        %641 = vmatmul.f32.gmra.mxu0 %v623
        %v642 = vpop.f32.mrf.mxu0
        %v643 = vadd.f32 0.0, %v642
        %644 = vdwg.mxu0
        %v645 = vrcp.pop %v617
        %v646 = vmul.f32 %v617, %v645
        %v647 = vsub.f32 1.0, %v646
        %v648 = vmul.f32 %v645, %v647
        %v649 = vadd.f32 %v645, %v648
        %vm650 = vweird.f32 %v617
        %vm651 = vweird.f32 %v645
        %vm652 = vmor %vm650, %vm651
        %v653 = vsel %vm652, %v645, %v649
        %v654 = vand.u32 2147483647, %v617
        %vm655 = vcmp.eq.f32.partialorder %v654, 8.507059e+37
        %v656 = vand.u32 %v617, 2147483648
        %v657 = vor.u32 1.1754944e-38, %v656
        %v658 = vsel %vm655, %v657, %v653
        %v659 = vmul.f32 %v643, %v658
        %661 = vrot.lane.b32.xlu0 %v659, 16
        %v662 = vpop.permute.xlu0 %661
        %vm664 = vcmask 261248
        %665 = vst.msk [vmem:[%s410] sm:$0xff] %vm664, %v662
        %666 = vrot.lane.b32.xlu0 %v445, 96
        %v667 = vpop.permute.xlu0 %666
        %668 = vrot.lane.b32.xlu0 %v475, 96
        %v669 = vpop.permute.xlu0 %668
        %v670 = vsel %vm505, %v667, 0
        %v672 = vsel %vm505, %v669, 0
        %674 = vmatpush.xpose.msra.mxu0 0.0
        %675 = vmatpush.xpose.msra.mxu0 0.0
        %676 = vmatpush.xpose.msra.mxu0 0.0
        %677 = vmatpush.xpose.msra.mxu0 0.0
        %678 = vmatpush.xpose.msra.mxu0 0.0
        %679 = vmatpush.xpose.msra.mxu0 0.0
        %680 = vmatpush.xpose.msra.mxu0 0.0
        %681 = vmatpush.xpose.msra.mxu0 0.0
        %682 = vmatpush.xpose.msra.mxu0 0.0
        %683 = vmatpush.xpose.msra.mxu0 0.0
        %684 = vmatpush.xpose.msra.mxu0 0.0
        %685 = vmatpush.xpose.msra.mxu0 0.0
        %686 = vmatpush.xpose.msra.mxu0 0.0
        %687 = vmatpush.xpose.msra.mxu0 0.0
        %688 = vmatpush.xpose.msra.mxu0 0.0
        %689 = vmatpush.xpose.msra.mxu0 %v672
        %690 = vmatmul.f32.gmra.mxu0 %v670
        %v691 = vpop.f32.mrf.mxu0
        %v692 = vadd.f32 0.0, %v691
        %693 = vdwg.mxu0
        %v694 = vsel %vm532, %v692, -inf
        %695 = vmax.xlane.f32.xlu0 %v694
        %v696 = vpop.xlane.xlu0 %695
        %v697 = vsub.f32 %v692, %v696
        %v698 = vmul.f32 %v697, 1.442695
        %v699 = vpow.pop %v698
        %v700 = vsel %vm532, %v699, 0.0
        %701 = vadd.xlane.f32.xlu0 %v700
        %v702 = vpop.xlane.xlu0 %701
        %703 = vrot.lane.b32.xlu0 %v503, 96
        %v704 = vpop.permute.xlu0 %703
        %v707 = vsel %vm532, %v699, 0
        %709 = vmatpush.msra.mxu0 0.0
        %710 = vmatpush.msra.mxu0 0.0
        %711 = vmatpush.msra.mxu0 0.0
        %712 = vmatpush.msra.mxu0 0.0
        %713 = vmatpush.msra.mxu0 0.0
        %714 = vmatpush.msra.mxu0 0.0
        %715 = vmatpush.msra.mxu0 0.0
        %716 = vmatpush.msra.mxu0 0.0
        %717 = vmatpush.msra.mxu0 0.0
        %718 = vmatpush.msra.mxu0 0.0
        %719 = vmatpush.msra.mxu0 0.0
        %720 = vmatpush.msra.mxu0 0.0
        %721 = vmatpush.msra.mxu0 0.0
        %722 = vmatpush.msra.mxu0 0.0
        %723 = vmatpush.msra.mxu0 0.0
        %724 = vmatpush.msra.mxu0 %v704
        %725 = vmatmul.f32.gmra.mxu0 %v707
        %v726 = vpop.f32.mrf.mxu0
        %v727 = vadd.f32 0.0, %v726
        %728 = vdwg.mxu0
        %v729 = vrcp.pop %v702
        %v730 = vmul.f32 %v702, %v729
        %v731 = vsub.f32 1.0, %v730
        %v732 = vmul.f32 %v729, %v731
        %v733 = vadd.f32 %v729, %v732
        %vm734 = vweird.f32 %v702
        %vm735 = vweird.f32 %v729
        %vm736 = vmor %vm734, %vm735
        %v737 = vsel %vm736, %v729, %v733
        %v738 = vand.u32 2147483647, %v702
        %vm739 = vcmp.eq.f32.partialorder %v738, 8.507059e+37
        %v740 = vand.u32 %v702, 2147483648
        %v741 = vor.u32 1.1754944e-38, %v740
        %v742 = vsel %vm739, %v741, %v737
        %v743 = vmul.f32 %v727, %v742
        %745 = vrot.lane.b32.xlu0 %v743, 32
        %v746 = vpop.permute.xlu0 %745
        %vm748 = vcmask 392448
        %749 = vst.msk [vmem:[%s410] sm:$0xff] %vm748, %v746
        %750 = vrot.lane.b32.xlu0 %v445, 80
        %v751 = vpop.permute.xlu0 %750
        %752 = vrot.lane.b32.xlu0 %v475, 80
        %v753 = vpop.permute.xlu0 %752
        %v754 = vsel %vm505, %v751, 0
        %v756 = vsel %vm505, %v753, 0
        %758 = vmatpush.xpose.msra.mxu0 0.0
        %759 = vmatpush.xpose.msra.mxu0 0.0
        %760 = vmatpush.xpose.msra.mxu0 0.0
        %761 = vmatpush.xpose.msra.mxu0 0.0
        %762 = vmatpush.xpose.msra.mxu0 0.0
        %763 = vmatpush.xpose.msra.mxu0 0.0
        %764 = vmatpush.xpose.msra.mxu0 0.0
        %765 = vmatpush.xpose.msra.mxu0 0.0
        %766 = vmatpush.xpose.msra.mxu0 0.0
        %767 = vmatpush.xpose.msra.mxu0 0.0
        %768 = vmatpush.xpose.msra.mxu0 0.0
        %769 = vmatpush.xpose.msra.mxu0 0.0
        %770 = vmatpush.xpose.msra.mxu0 0.0
        %771 = vmatpush.xpose.msra.mxu0 0.0
        %772 = vmatpush.xpose.msra.mxu0 0.0
        %773 = vmatpush.xpose.msra.mxu0 %v756
        %774 = vmatmul.f32.gmra.mxu0 %v754
        %v775 = vpop.f32.mrf.mxu0
        %v776 = vadd.f32 0.0, %v775
        %777 = vdwg.mxu0
        %v778 = vsel %vm532, %v776, -inf
        %779 = vmax.xlane.f32.xlu0 %v778
        %v780 = vpop.xlane.xlu0 %779
        %v781 = vsub.f32 %v776, %v780
        %v782 = vmul.f32 %v781, 1.442695
        %v783 = vpow.pop %v782
        %v784 = vsel %vm532, %v783, 0.0
        %785 = vadd.xlane.f32.xlu0 %v784
        %v786 = vpop.xlane.xlu0 %785
        %787 = vrot.lane.b32.xlu0 %v503, 80
        %v788 = vpop.permute.xlu0 %787
        %v791 = vsel %vm532, %v783, 0
        %793 = vmatpush.msra.mxu0 0.0
        %794 = vmatpush.msra.mxu0 0.0
        %795 = vmatpush.msra.mxu0 0.0
        %796 = vmatpush.msra.mxu0 0.0
        %797 = vmatpush.msra.mxu0 0.0
        %798 = vmatpush.msra.mxu0 0.0
        %799 = vmatpush.msra.mxu0 0.0
        %800 = vmatpush.msra.mxu0 0.0
        %801 = vmatpush.msra.mxu0 0.0
        %802 = vmatpush.msra.mxu0 0.0
        %803 = vmatpush.msra.mxu0 0.0
        %804 = vmatpush.msra.mxu0 0.0
        %805 = vmatpush.msra.mxu0 0.0
        %806 = vmatpush.msra.mxu0 0.0
        %807 = vmatpush.msra.mxu0 0.0
        %808 = vmatpush.msra.mxu0 %v788
        %809 = vmatmul.f32.gmra.mxu0 %v791
        %v810 = vpop.f32.mrf.mxu0
        %v811 = vadd.f32 0.0, %v810
        %812 = vdwg.mxu0
        %v813 = vrcp.pop %v786
        %v814 = vmul.f32 %v786, %v813
        %v815 = vsub.f32 1.0, %v814
        %v816 = vmul.f32 %v813, %v815
        %v817 = vadd.f32 %v813, %v816
        %vm818 = vweird.f32 %v786
        %vm819 = vweird.f32 %v813
        %vm820 = vmor %vm818, %vm819
        %v821 = vsel %vm820, %v813, %v817
        %v822 = vand.u32 2147483647, %v786
        %vm823 = vcmp.eq.f32.partialorder %v822, 8.507059e+37
        %v824 = vand.u32 %v786, 2147483648
        %v825 = vor.u32 1.1754944e-38, %v824
        %v826 = vsel %vm823, %v825, %v821
        %v827 = vmul.f32 %v811, %v826
        %829 = vrot.lane.b32.xlu0 %v827, 48
        %v830 = vpop.permute.xlu0 %829
        %vm832 = vcmask 523648
        %833 = vst.msk [vmem:[%s410] sm:$0xff] %vm832, %v830
        %s834 = sand.u32 %s215, 1
        %s835 = scalar_lea.sflag [#allocation4], %s834
        %s836 = sand.u32 %s215, 1
        %s837 = smul.addr %s836, 8
        %s838 = scalar_lea.vmem [#allocation11], %s837
        // Predicated region
        $region73: #{tpu_custom_call.1} parent=51 // pred_check
          %p839 = pneg %p225
        $region74: #{tpu_custom_call.1} parent=51 // pred_check_branch
          %841 = sbr.rel (%p839) target = $region76
        $region75: #{tpu_custom_call.1} parent=51 // pred_region
          %843 = vsyncadd %s835, 0
          %s844 = smul.addr %s29, 8
          %s845 = scalar_lea.hbm %s8, %s844
          %s847 = sshll.u32 %s838, 4
          %s848 = int_to_ptr.vmem [resolvable:$true] %s847
          %s849 = sshll.u32 %s845, 4
          %s850 = int_to_ptr.hbm [resolvable:$true] %s849
          %852 = dma.vmem_to_hbm [thread:$0]  %s848, 128, %s850, %s835
        $region76: #{tpu_custom_call.1} parent=51 // pred_fallthru
          _
      $region52: #{tpu_custom_call.1} parent=5 // pred_fallthru
        _
      %p853 = scmp.le.s32.totalorder 2, %s24
      // Predicated region
      $region77: #{tpu_custom_call.1} parent=5 // pred_check
        %p854 = pneg %p853
      $region78: #{tpu_custom_call.1} parent=5 // pred_check_branch
        %856 = sbr.rel (%p854) target = $region80
      $region79: #{tpu_custom_call.1} parent=5 // pred_region
        %s857 = ssub.s32 %s24, 2
        // Predicated region
        $region81: #{tpu_custom_call.1} parent=79 // pred_check
          %p858 = pneg %p231
        $region82: #{tpu_custom_call.1} parent=79 // pred_check_branch
          %860 = sbr.rel (%p858) target = $region84
        $region83: #{tpu_custom_call.1} parent=79 // pred_region
          %s861 = sand.u32 %s216, 1
          %s862 = scalar_lea.sflag [#allocation4], %s861
          %s863 = sand.u32 %s216, 1
          %s864 = smul.addr %s863, 8
          %s865 = scalar_lea.vmem [#allocation11], %s864
          %867 = dma.done %s862, 128
        $region84: #{tpu_custom_call.1} parent=79 // pred_fallthru
          _
      $region80: #{tpu_custom_call.1} parent=5 // pred_fallthru
        _
    $region6: #{tpu_custom_call.1} parent=1 // loop_footer
      %s28 = sadd.s32 1, %s24
    $region7: #{tpu_custom_call.1} parent=1 // loop_footer_branch
      %23 = sbr.rel target = $region3
    $region8: #{tpu_custom_call.1} parent=1 // loop_exit
      _
    %868 = vsyncpa [#allocation3], 1
    %s869 = scalar_lea.sflag [#allocation3], 1
    %870 = vsyncpa %s869, 1
    %871 = vsyncpa [#allocation6], 1
    %s872 = scalar_lea.sflag [#allocation6], 1
    %873 = vsyncpa %s872, 1
    %874 = vsyncpa [#allocation9], 1
    %875 = vsyncpa [#allocation4], 1
    %s876 = scalar_lea.sflag [#allocation4], 1
    %877 = vsyncpa %s876, 1

</llo_original>
